<compile_context>
chip_gen: v5e
topology: v5e:2x2
jax: 0.10.0
libtpu: 0.0.40
codegen_flags: <defaults>
</compile_context>

<pallas_src>
import jax
import jax.numpy as jnp
from jax.experimental import pallas as pl
from jax.experimental.pallas import tpu as pltpu


def _round_up(v, m):
    return (v + m - 1) // m * m


def _cdiv(a, b):
    return -(-a // b)


def _tpu_vmem_capacity():
    try:
        info = pltpu.get_tpu_info()
        cap = int(getattr(info, "vmem_capacity_bytes", 0))
        if cap > 0:
            return cap
    except Exception:
        pass
    return 128 << 20  # v5e/v6e default


def _pick_batch_tile(B, vmem_cap):
    """Generation-aware batch tile: big enough to amortize per-step overhead,
    small enough to fit VMEM and (on 2-TC parts) leave >= 2 tiles for sharding."""
    small_vmem = vmem_cap <= (64 << 20)  # v7x-like: 2 TCs, 64 MiB VMEM each
    cap = 256 if small_vmem else 512
    tb = min(cap, _round_up(B, 8))
    if small_vmem and B > 128:
        # Keep at least two batch tiles so the "parallel" axis can use both TCs.
        tb = min(tb, _round_up(_cdiv(B, 2), 128))
    return max(tb, 8)


def mlp_kernel(x_ref, w1_ref, b1_ref, w2_ref, b2_ref, out_ref):
    # Hidden layer: (TB, IN)bf16 @ (IN, Hp)bf16 -> f32 accum; bias + ReLU in f32.
    h = jnp.dot(x_ref[...], w1_ref[...], preferred_element_type=jnp.float32)
    h = jnp.maximum(h + b1_ref[...], 0.0)
    # Output layer: feed bf16 back to the MXU, accumulate in f32.
    o = jnp.dot(h.astype(jnp.bfloat16), w2_ref[...],
                preferred_element_type=jnp.float32)
    out_ref[...] = (o + b2_ref[...]).astype(out_ref.dtype)


def prepare_params(w1, b1, w2, b2):
    """One-time parameter prep: pad feature dims to lane-dense multiples of 128
    and cast matmul operands to bf16. Do this once (or cache it), not per call."""
    IN, H = w1.shape
    OUT = w2.shape[1]
    Hp = _round_up(H, 128)
    OUTp = _round_up(OUT, 128)
    w1_p = jnp.zeros((IN, Hp), jnp.bfloat16).at[:, :H].set(w1.astype(jnp.bfloat16))
    b1_p = jnp.zeros((1, Hp), jnp.float32).at[:, :H].set(
        b1.reshape(1, -1).astype(jnp.float32))
    w2_p = jnp.zeros((Hp, OUTp), jnp.bfloat16).at[:H, :OUT].set(w2.astype(jnp.bfloat16))
    b2_p = jnp.zeros((1, OUTp), jnp.float32).at[:, :OUT].set(
        b2.reshape(1, -1).astype(jnp.float32))
    return {"w1": w1_p, "b1": b1_p, "w2": w2_p, "b2": b2_p, "out_features": OUT}


def _build_call(Bp, IN, Hp, OUTp, TB, vmem_limit, cost, single_buffer_weights):
    resident_kw = {}
    if single_buffer_weights:
        # Constant index_map => the block never changes; 1 buffer is enough.
        resident_kw = dict(pipeline_mode=pl.Buffered(1))
    in_specs = [
        pl.BlockSpec((TB, IN), lambda i: (i, 0)),                  # batch-tiled x
        pl.BlockSpec((IN, Hp), lambda i: (0, 0), **resident_kw),   # resident W1
        pl.BlockSpec((1, Hp), lambda i: (0, 0), **resident_kw),    # resident b1
        pl.BlockSpec((Hp, OUTp), lambda i: (0, 0), **resident_kw), # resident W2
        pl.BlockSpec((1, OUTp), lambda i: (0, 0), **resident_kw),  # resident b2
    ]
    return pl.pallas_call(
        mlp_kernel,
        out_shape=jax.ShapeDtypeStruct((Bp, OUTp), jnp.float32),
        grid=(Bp // TB,),
        in_specs=in_specs,
        out_specs=pl.BlockSpec((TB, OUTp), lambda i: (i, 0)),
        compiler_params=pltpu.CompilerParams(
            dimension_semantics=("parallel",),   # batch tiles shard across TCs
            vmem_limit_bytes=vmem_limit,
        ),
        cost_estimate=cost,
    )


def multi_class_classification(x, params, *, batch_tile=None):
    """x:(B, IN) f32, params from prepare_params() -> (B, OUT) f32."""
    w1_p, b1_p, w2_p, b2_p = params["w1"], params["b1"], params["w2"], params["b2"]
    OUT = params["out_features"]
    B, IN = x.shape
    IN_w, Hp = w1_p.shape
    OUTp = w2_p.shape[1]
    assert IN == IN_w, "x feature dim must match prepared weights"

    vmem_cap = _tpu_vmem_capacity()
    TB = batch_tile if batch_tile is not None else _pick_batch_tile(B, vmem_cap)
    Bp = _round_up(B, TB)

    # Activations: cast to bf16; pad only when the batch tile does not divide B.
    x_bf = x.astype(jnp.bfloat16)
    if Bp != B:
        x_bf = jnp.pad(x_bf, ((0, Bp - B), (0, 0)))

    # VMEM estimate (worst case: 2 buffers on everything auto-pipelined) + cap at
    # ~75% of the physical per-core VMEM of this TPU generation.
    est = (
        2 * TB * IN * 2                         # x tiles (bf16), double-buffered
        + 2 * TB * OUTp * 4                     # out tiles (f32), double-buffered
        + 2 * (IN * Hp * 2 + Hp * OUTp * 2)     # weights (bf16), <=2 buffers
        + 2 * (Hp + OUTp) * 4                   # biases (f32), <=2 buffers
        + TB * Hp * (4 + 2)                     # f32 hidden + bf16 recast intermediate
    )
    vmem_limit = int(min(max(2 * est, 16 << 20), 0.75 * vmem_cap))

    cost = pl.CostEstimate(
        flops=2 * Bp * IN * Hp + 2 * Bp * Hp * OUTp,
        transcendentals=0,
        bytes_accessed=(Bp * IN * 2 + Bp * OUTp * 4
                        + IN * Hp * 2 + Hp * OUTp * 2 + (Hp + OUTp) * 4),
    )

    args = (x_bf, w1_p, b1_p, w2_p, b2_p)
    out_padded = None
    if hasattr(pl, "Buffered"):
        try:
            out_padded = _build_call(Bp, IN, Hp, OUTp, TB, vmem_limit, cost,
                                     single_buffer_weights=True)(*args)
        except Exception:
            out_padded = None  # fall back to default double-buffered weights
    if out_padded is None:
        out_padded = _build_call(Bp, IN, Hp, OUTp, TB, vmem_limit, cost,
                                 single_buffer_weights=False)(*args)

    # Skip the slice entirely when everything is already aligned.
    if Bp == B and OUTp == OUT:
        return out_padded
    return out_padded[:B, :OUT]


def init_params(key, in_features, hidden, out_features):
    # Deterministic init mimicking PyTorch nn.Linear: U(-1/sqrt(fan_in), 1/sqrt(fan_in)).
    k1, k2, k3, k4 = jax.random.split(key, 4)
    bound1 = 1.0 / jnp.sqrt(in_features)
    bound2 = 1.0 / jnp.sqrt(hidden)
    w1 = jax.random.uniform(k1, (in_features, hidden), jnp.float32, -bound1, bound1)
    b1 = jax.random.uniform(k2, (1, hidden), jnp.float32, -bound1, bound1)
    w2 = jax.random.uniform(k3, (hidden, out_features), jnp.float32, -bound2, bound2)
    b2 = jax.random.uniform(k4, (1, out_features), jnp.float32, -bound2, bound2)
    return w1, b1, w2, b2


if __name__ == "__main__":
    # Small shapes consistent with the module's forward: x is (batch, input_features).
    B, IN, H, OUT = 8, 32, 64, 16

    key = jax.random.PRNGKey(0)
    kx, kp = jax.random.split(key)
    x = jax.random.normal(kx, (B, IN), jnp.float32)
    w1, b1, w2, b2 = init_params(kp, IN, H, OUT)

    # One-time parameter prep (padding + bf16 cast hoisted out of the forward).
    params = prepare_params(w1, b1, w2, b2)

    out = multi_class_classification(x, params)
    out = jax.block_until_ready(out)
    assert out.shape == (B, OUT)

    # Reference 1: mirror the kernel's bf16 MXU inputs (tight tolerance).
    xb, w1b, w2b = (a.astype(jnp.bfloat16) for a in (x, w1, w2))
    h_ref = jnp.maximum(
        jnp.dot(xb, w1b, preferred_element_type=jnp.float32) + b1, 0.0)
    ref_bf16 = jnp.dot(h_ref.astype(jnp.bfloat16), w2b,
                       preferred_element_type=jnp.float32) + b2
    assert jnp.allclose(out, ref_bf16, atol=1e-2, rtol=1e-2)

    # Reference 2: full-f32 math (loose tolerance — bounds the bf16 cast error).
    ref_f32 = jnp.maximum(x @ w1 + b1, 0.0) @ w2 + b2
    assert jnp.allclose(out, ref_f32, atol=5e-2, rtol=5e-2)

    print("KERNEL_OK")
</pallas_src>

<mosaic_0001>
module attributes {stable_mosaic.version = 11 : i64} {
  func.func @mlp_kernel(%arg0: i32, %arg1: memref<8x32xbf16, #tpu.memory_space<vmem>>, %arg2: memref<32x128xbf16, #tpu.memory_space<vmem>>, %arg3: memref<1x128xf32, #tpu.memory_space<vmem>>, %arg4: memref<128x128xbf16, #tpu.memory_space<vmem>>, %arg5: memref<1x128xf32, #tpu.memory_space<vmem>>, %arg6: memref<8x128xf32, #tpu.memory_space<vmem>>) attributes {dimension_semantics = [#tpu.dimension_semantics<parallel>], iteration_bounds = array<i64: 1>, scalar_prefetch = 0 : i64, scratch_operands = 0 : i64, tpu.core_type = #tpu.core_type<tc>, window_params = [{transform_indices = @transform_0, window_bounds = array<i64: 8, 32>}, {pipeline_mode = #tpu.pipeline_mode<synchronous>, transform_indices = @transform_1, window_bounds = array<i64: 32, 128>}, {pipeline_mode = #tpu.pipeline_mode<synchronous>, transform_indices = @transform_2, window_bounds = array<i64: 1, 128>}, {pipeline_mode = #tpu.pipeline_mode<synchronous>, transform_indices = @transform_3, window_bounds = array<i64: 128, 128>}, {pipeline_mode = #tpu.pipeline_mode<synchronous>, transform_indices = @transform_4, window_bounds = array<i64: 1, 128>}, {transform_indices = @transform_5, window_bounds = array<i64: 8, 128>}]} {
    %c0 = arith.constant 0 : index
    %c0_0 = arith.constant 0 : index
    %0 = vector.load %arg1[%c0, %c0_0] : memref<8x32xbf16, #tpu.memory_space<vmem>>, vector<8x32xbf16>
    %c0_1 = arith.constant 0 : index
    %c0_2 = arith.constant 0 : index
    %1 = vector.load %arg2[%c0_1, %c0_2] : memref<32x128xbf16, #tpu.memory_space<vmem>>, vector<32x128xbf16>
    %cst = arith.constant dense<0.000000e+00> : vector<8x128xf32>
    %2 = tpu.matmul %0, %1, %cst {dimension_numbers = #tpu.dot_dimension_numbers<[1], [0], [0], [1], [0, 0, 1, 1], [], []>} : vector<8x32xbf16>, vector<32x128xbf16>, vector<8x128xf32> -> vector<8x128xf32>
    %c0_3 = arith.constant 0 : index
    %c0_4 = arith.constant 0 : index
    %3 = vector.load %arg3[%c0_3, %c0_4] : memref<1x128xf32, #tpu.memory_space<vmem>>, vector<1x128xf32>
    %4 = vector.broadcast %3 : vector<1x128xf32> to vector<8x128xf32>
    %5 = arith.addf %2, %4 : vector<8x128xf32>
    %cst_5 = arith.constant 0.000000e+00 : f32
    %6 = vector.broadcast %cst_5 : f32 to vector<8x128xf32>
    %7 = arith.maximumf %5, %6 : vector<8x128xf32>
    %8 = arith.truncf %7 : vector<8x128xf32> to vector<8x128xbf16>
    %c0_6 = arith.constant 0 : index
    %c0_7 = arith.constant 0 : index
    %9 = vector.load %arg4[%c0_6, %c0_7] : memref<128x128xbf16, #tpu.memory_space<vmem>>, vector<128x128xbf16>
    %cst_8 = arith.constant dense<0.000000e+00> : vector<8x128xf32>
    %10 = tpu.matmul %8, %9, %cst_8 {dimension_numbers = #tpu.dot_dimension_numbers<[1], [0], [0], [1], [0, 0, 1, 1], [], []>} : vector<8x128xbf16>, vector<128x128xbf16>, vector<8x128xf32> -> vector<8x128xf32>
    %c0_9 = arith.constant 0 : index
    %c0_10 = arith.constant 0 : index
    %11 = vector.load %arg5[%c0_9, %c0_10] : memref<1x128xf32, #tpu.memory_space<vmem>>, vector<1x128xf32>
    %12 = vector.broadcast %11 : vector<1x128xf32> to vector<8x128xf32>
    %13 = arith.addf %10, %12 : vector<8x128xf32>
    %c0_11 = arith.constant 0 : index
    %c0_12 = arith.constant 0 : index
    %14 = vector.load %arg6[%c0_11, %c0_12] : memref<8x128xf32, #tpu.memory_space<vmem>>, vector<8x128xf32>
    tpu.vector_store %arg6[%c0_11, %c0_12], %13 {strides = array<i32>} : memref<8x128xf32, #tpu.memory_space<vmem>>, vector<8x128xf32>,
    return
  }
  func.func @transform_0(%arg0: i32) -> (i32, i32) {
    %c0_i32 = arith.constant 0 : i32
    %c0_i32_0 = arith.constant 0 : i32
    return %arg0, %c0_i32 : i32, i32
  }
  func.func @transform_1(%arg0: i32) -> (i32, i32) {
    %c0_i32 = arith.constant 0 : i32
    %c0_i32_0 = arith.constant 0 : i32
    %c0_i32_1 = arith.constant 0 : i32
    return %c0_i32, %c0_i32_0 : i32, i32
  }
  func.func @transform_2(%arg0: i32) -> (i32, i32) {
    %c0_i32 = arith.constant 0 : i32
    %c0_i32_0 = arith.constant 0 : i32
    %c0_i32_1 = arith.constant 0 : i32
    return %c0_i32, %c0_i32_0 : i32, i32
  }
  func.func @transform_3(%arg0: i32) -> (i32, i32) {
    %c0_i32 = arith.constant 0 : i32
    %c0_i32_0 = arith.constant 0 : i32
    %c0_i32_1 = arith.constant 0 : i32
    return %c0_i32, %c0_i32_0 : i32, i32
  }
  func.func @transform_4(%arg0: i32) -> (i32, i32) {
    %c0_i32 = arith.constant 0 : i32
    %c0_i32_0 = arith.constant 0 : i32
    %c0_i32_1 = arith.constant 0 : i32
    return %c0_i32, %c0_i32_0 : i32, i32
  }
  func.func @transform_5(%arg0: i32) -> (i32, i32) {
    %c0_i32 = arith.constant 0 : i32
    %c0_i32_0 = arith.constant 0 : i32
    return %arg0, %c0_i32 : i32, i32
  }
}

module attributes {stable_mosaic.version = 11 : i64} {
  func.func @mlp_kernel(%arg0: i32, %arg1: memref<8x32xbf16, #tpu.memory_space<vmem>>, %arg2: memref<32x128xbf16, #tpu.memory_space<vmem>>, %arg3: memref<1x128xf32, #tpu.memory_space<vmem>>, %arg4: memref<128x128xbf16, #tpu.memory_space<vmem>>, %arg5: memref<1x128xf32, #tpu.memory_space<vmem>>, %arg6: memref<8x128xf32, #tpu.memory_space<vmem>>) attributes {dimension_semantics = [#tpu.dimension_semantics<parallel>], iteration_bounds = array<i64: 1>, scalar_prefetch = 0 : i64, scratch_operands = 0 : i64, tpu.core_type = #tpu.core_type<tc>, window_params = [{transform_indices = @transform_0, window_bounds = array<i64: 8, 32>}, {pipeline_mode = #tpu.pipeline_mode<synchronous>, transform_indices = @transform_1, window_bounds = array<i64: 32, 128>}, {pipeline_mode = #tpu.pipeline_mode<synchronous>, transform_indices = @transform_2, window_bounds = array<i64: 1, 128>}, {pipeline_mode = #tpu.pipeline_mode<synchronous>, transform_indices = @transform_3, window_bounds = array<i64: 128, 128>}, {pipeline_mode = #tpu.pipeline_mode<synchronous>, transform_indices = @transform_4, window_bounds = array<i64: 1, 128>}, {transform_indices = @transform_5, window_bounds = array<i64: 8, 128>}]} {
    %c0 = arith.constant 0 : index
    %c0_0 = arith.constant 0 : index
    %0 = vector.load %arg1[%c0, %c0_0] : memref<8x32xbf16, #tpu.memory_space<vmem>>, vector<8x32xbf16>
    %c0_1 = arith.constant 0 : index
    %c0_2 = arith.constant 0 : index
    %1 = vector.load %arg2[%c0_1, %c0_2] : memref<32x128xbf16, #tpu.memory_space<vmem>>, vector<32x128xbf16>
    %cst = arith.constant dense<0.000000e+00> : vector<8x128xf32>
    %2 = tpu.matmul %0, %1, %cst {dimension_numbers = #tpu.dot_dimension_numbers<[1], [0], [0], [1], [0, 0, 1, 1], [], []>} : vector<8x32xbf16>, vector<32x128xbf16>, vector<8x128xf32> -> vector<8x128xf32>
    %c0_3 = arith.constant 0 : index
    %c0_4 = arith.constant 0 : index
    %3 = vector.load %arg3[%c0_3, %c0_4] : memref<1x128xf32, #tpu.memory_space<vmem>>, vector<1x128xf32>
    %4 = vector.broadcast %3 : vector<1x128xf32> to vector<8x128xf32>
    %5 = arith.addf %2, %4 : vector<8x128xf32>
    %cst_5 = arith.constant 0.000000e+00 : f32
    %6 = vector.broadcast %cst_5 : f32 to vector<8x128xf32>
    %7 = arith.maximumf %5, %6 : vector<8x128xf32>
    %8 = arith.truncf %7 : vector<8x128xf32> to vector<8x128xbf16>
    %c0_6 = arith.constant 0 : index
    %c0_7 = arith.constant 0 : index
    %9 = vector.load %arg4[%c0_6, %c0_7] : memref<128x128xbf16, #tpu.memory_space<vmem>>, vector<128x128xbf16>
    %cst_8 = arith.constant dense<0.000000e+00> : vector<8x128xf32>
    %10 = tpu.matmul %8, %9, %cst_8 {dimension_numbers = #tpu.dot_dimension_numbers<[1], [0], [0], [1], [0, 0, 1, 1], [], []>} : vector<8x128xbf16>, vector<128x128xbf16>, vector<8x128xf32> -> vector<8x128xf32>
    %c0_9 = arith.constant 0 : index
    %c0_10 = arith.constant 0 : index
    %11 = vector.load %arg5[%c0_9, %c0_10] : memref<1x128xf32, #tpu.memory_space<vmem>>, vector<1x128xf32>
    %12 = vector.broadcast %11 : vector<1x128xf32> to vector<8x128xf32>
    %13 = arith.addf %10, %12 : vector<8x128xf32>
    %c0_11 = arith.constant 0 : index
    %c0_12 = arith.constant 0 : index
    %14 = vector.load %arg6[%c0_11, %c0_12] : memref<8x128xf32, #tpu.memory_space<vmem>>, vector<8x128xf32>
    tpu.vector_store %arg6[%c0_11, %c0_12], %13 {strides = array<i32>} : memref<8x128xf32, #tpu.memory_space<vmem>>, vector<8x128xf32>,
    return
  }
  func.func @transform_0(%arg0: i32) -> (i32, i32) {
    %c0_i32 = arith.constant 0 : i32
    %c0_i32_0 = arith.constant 0 : i32
    return %arg0, %c0_i32 : i32, i32
  }
  func.func @transform_1(%arg0: i32) -> (i32, i32) {
    %c0_i32 = arith.constant 0 : i32
    %c0_i32_0 = arith.constant 0 : i32
    %c0_i32_1 = arith.constant 0 : i32
    return %c0_i32, %c0_i32_0 : i32, i32
  }
  func.func @transform_2(%arg0: i32) -> (i32, i32) {
    %c0_i32 = arith.constant 0 : i32
    %c0_i32_0 = arith.constant 0 : i32
    %c0_i32_1 = arith.constant 0 : i32
    return %c0_i32, %c0_i32_0 : i32, i32
  }
  func.func @transform_3(%arg0: i32) -> (i32, i32) {
    %c0_i32 = arith.constant 0 : i32
    %c0_i32_0 = arith.constant 0 : i32
    %c0_i32_1 = arith.constant 0 : i32
    return %c0_i32, %c0_i32_0 : i32, i32
  }
  func.func @transform_4(%arg0: i32) -> (i32, i32) {
    %c0_i32 = arith.constant 0 : i32
    %c0_i32_0 = arith.constant 0 : i32
    %c0_i32_1 = arith.constant 0 : i32
    return %c0_i32, %c0_i32_0 : i32, i32
  }
  func.func @transform_5(%arg0: i32) -> (i32, i32) {
    %c0_i32 = arith.constant 0 : i32
    %c0_i32_0 = arith.constant 0 : i32
    return %arg0, %c0_i32 : i32, i32
  }
}

</mosaic_0001>

<llo_original>
// kernel: tpu_custom_call.1
$region0: #{tpu_custom_call.1}
  #allocation0 [shape = 'u32[]', space=smem, size = 0x4, offset = 0x4, fixed_abs, tag = 'smem constant byte address 0x4 - core index']
  #allocation1 [shape = 'u32[72,128]{1,0:T(1,128)}', space=vmem, size = 0x9000, scoped, tag = 'internal scratch']
  %s0 = inlined_call_operand.hbm [shape: bf16[8,32], index: 0, kind: input, shape index: {}]
  %s1 = inlined_call_operand.hbm [shape: bf16[32,128], index: 1, kind: input, shape index: {}]
  %s2 = inlined_call_operand.vmem [shape: f32[1,128], index: 2, kind: input, shape index: {}]
  %s3 = inlined_call_operand.hbm [shape: bf16[128,128], index: 3, kind: input, shape index: {}]
  %s4 = inlined_call_operand.vmem [shape: f32[1,128], index: 4, kind: input, shape index: {}]
  %s5 = inlined_call_operand.hbm [shape: f32[8,128], index: 5, kind: output, shape index: {}]
  %s6 = sld [smem:[#allocation0]]
  $region42: #{tpu_custom_call.1} parent=0
    _
  %s8 = ssub.s32 1, %s6
  %s9 = scalar_select 0, %s8, %s6
  $region1: #{tpu_custom_call.1} parent=0
    #allocation2 [shape = 'u8[2048]{0}', space=vmem, size = 0x800, scoped, tag = 'input window, operand 0, single buffered']
    #allocation3 [shape = 's32[1]{0}', space=sflag, size = 0x4, scoped, tag = 'scoped memory for tpu_custom_call.1']
    #allocation4 [shape = 's32[1]{0}', space=sflag, size = 0x4, scoped, tag = 'scoped memory for tpu_custom_call.1']
    #allocation5 [shape = 'u8[8192]{0}', space=vmem, size = 0x2000, scoped, tag = 'input window, operand 1, single buffered']
    #allocation6 [shape = 's32[1]{0}', space=sflag, size = 0x4, scoped, tag = 'scoped memory for tpu_custom_call.1']
    #allocation7 [shape = 'u8[32768]{0}', space=vmem, size = 0x8000, scoped, tag = 'input window, operand 3, single buffered']
    #allocation8 [shape = 'u8[4096]{0}', space=vmem, size = 0x1000, scoped, tag = 'output window, operand 0, single buffered']
    %10 = vsyncpa [#allocation3], 0
    %11 = vsyncpa [#allocation6], 0
    %12 = vsyncpa [#allocation4], 0
    // Predicated region
    $region2: #{tpu_custom_call.1} parent=1 // pred_check
      _
    $region3: #{tpu_custom_call.1} parent=1 // pred_check_branch
      %14 = sbr.rel (0) target = $region5
    $region4: #{tpu_custom_call.1} parent=1 // pred_region
      %16 = vsyncadd [#allocation3], 0
      %s18 = sshll.u32 %s0, 4
      %s19 = int_to_ptr.hbm [resolvable:$true] %s18
      %s20 = sshll.u32 [#allocation2], 4
      %s21 = int_to_ptr.vmem [resolvable:$true] %s20
      %23 = dma.hbm_to_vmem [thread:$0]  %s19, 64, %s21, [#allocation3]
    $region5: #{tpu_custom_call.1} parent=1 // pred_fallthru
      _
    // Predicated region
    $region6: #{tpu_custom_call.1} parent=1 // pred_check
      _
    $region7: #{tpu_custom_call.1} parent=1 // pred_check_branch
      %25 = sbr.rel (0) target = $region9
    $region8: #{tpu_custom_call.1} parent=1 // pred_region
      %27 = vsyncadd [#allocation6], 0
      %s28 = sshll.u32 %s1, 4
      %s29 = int_to_ptr.hbm [resolvable:$true] %s28
      %s30 = sshll.u32 [#allocation5], 4
      %s31 = int_to_ptr.vmem [resolvable:$true] %s30
      %36 = dma.hbm_to_vmem [thread:$0]  %s29, 256, %s31, [#allocation6], 64, 64, 4
    $region9: #{tpu_custom_call.1} parent=1 // pred_fallthru
      _
    // Predicated region
    $region10: #{tpu_custom_call.1} parent=1 // pred_check
      _
    $region11: #{tpu_custom_call.1} parent=1 // pred_check_branch
      %38 = sbr.rel (0) target = $region13
    $region12: #{tpu_custom_call.1} parent=1 // pred_region
      _
    $region13: #{tpu_custom_call.1} parent=1 // pred_fallthru
      _
    // Predicated region
    $region14: #{tpu_custom_call.1} parent=1 // pred_check
      _
    $region15: #{tpu_custom_call.1} parent=1 // pred_check_branch
      %40 = sbr.rel (0) target = $region17
    $region16: #{tpu_custom_call.1} parent=1 // pred_region
      %42 = vsyncadd [#allocation6], 0
      %s43 = sshll.u32 %s3, 4
      %s44 = int_to_ptr.hbm [resolvable:$true] %s43
      %s45 = sshll.u32 [#allocation7], 4
      %s46 = int_to_ptr.vmem [resolvable:$true] %s45
      %51 = dma.hbm_to_vmem [thread:$0]  %s44, 1024, %s46, [#allocation6], 64, 64, 4
    $region17: #{tpu_custom_call.1} parent=1 // pred_fallthru
      _
    // Predicated region
    $region18: #{tpu_custom_call.1} parent=1 // pred_check
      _
    $region19: #{tpu_custom_call.1} parent=1 // pred_check_branch
      %53 = sbr.rel (0) target = $region21
    $region20: #{tpu_custom_call.1} parent=1 // pred_region
      _
    $region21: #{tpu_custom_call.1} parent=1 // pred_fallthru
      _
    // Predicated region
    $region22: #{tpu_custom_call.1} parent=1 // pred_check
      _
    $region23: #{tpu_custom_call.1} parent=1 // pred_check_branch
      %55 = sbr.rel (0) target = $region25
    $region24: #{tpu_custom_call.1} parent=1 // pred_region
      %57 = dma.done [#allocation3], 64
    $region25: #{tpu_custom_call.1} parent=1 // pred_fallthru
      _
    // Predicated region
    $region26: #{tpu_custom_call.1} parent=1 // pred_check
      _
    $region27: #{tpu_custom_call.1} parent=1 // pred_check_branch
      %59 = sbr.rel (0) target = $region29
    $region28: #{tpu_custom_call.1} parent=1 // pred_region
      %61 = dma.done [#allocation6], 256
    $region29: #{tpu_custom_call.1} parent=1 // pred_fallthru
      _
    // Predicated region
    $region30: #{tpu_custom_call.1} parent=1 // pred_check
      _
    $region31: #{tpu_custom_call.1} parent=1 // pred_check_branch
      %63 = sbr.rel (0) target = $region33
    $region32: #{tpu_custom_call.1} parent=1 // pred_region
      %65 = dma.done [#allocation6], 1024
    $region33: #{tpu_custom_call.1} parent=1 // pred_fallthru
      _
    %v67 = vld [vmem:[#allocation2] sm:$0xf]
    %v68 = vld [vmem:[#allocation5] sm:$0xf]
    %v69 = vld [vmem:[#allocation5 + $0x4] sm:$0xf]
    %v70 = vld [vmem:[#allocation5 + $0x8] sm:$0xf]
    %v71 = vld [vmem:[#allocation5 + $0xc] sm:$0xf]
    %v72 = vld [vmem:[%s2] sm:$0x1]
    %v74 = vperm.slane %v72, 0
    %v80 = vunpack.c.l.b16 %v68
    %v81 = vunpack.c.l.b16 %v69
    %v82 = vunpack.c.l.b16 %v70
    %v83 = vunpack.c.l.b16 %v71
    %v84 = vpack.c.b16 %v81, %v80
    %v85 = vpack.c.b16 %v83, %v82
    %vm88 = vcmask 261120
    %v90 = vsel %vm88, %v67, 0
    %92 = vmatpush.bf16.msra.mxu0 0
    %93 = vmatpush.bf16.msra.mxu0 0
    %94 = vmatpush.bf16.msra.mxu0 0
    %95 = vmatpush.bf16.msra.mxu0 0
    %96 = vmatpush.bf16.msra.mxu0 0
    %97 = vmatpush.bf16.msra.mxu0 0
    %98 = vmatpush.bf16.msra.mxu0 %v85
    %99 = vmatpush.bf16.msra.mxu0 %v84
    %100 = vmatmul.bf16.gmra.mxu0 %v90
    %v101 = vpop.f32.mrf.mxu0
    %v102 = vadd.f32 %v74, %v101
    %v103 = vpop.f32.mrf.mxu0
    %104 = vdwg.mxu0
    %v105 = vmax.f32 %v102, 0.0
    %v106 = vpack.c.bf16 %v105, %v105
    %v107 = vld [vmem:[#allocation7] sm:$0xf]
    %v108 = vld [vmem:[#allocation7 + $0x4] sm:$0xf]
    %v109 = vld [vmem:[#allocation7 + $0x8] sm:$0xf]
    %v110 = vld [vmem:[#allocation7 + $0xc] sm:$0xf]
    %v111 = vld [vmem:[#allocation7 + $0x10] sm:$0xf]
    %v112 = vld [vmem:[#allocation7 + $0x14] sm:$0xf]
    %v113 = vld [vmem:[#allocation7 + $0x18] sm:$0xf]
    %v114 = vld [vmem:[#allocation7 + $0x1c] sm:$0xf]
    %v115 = vld [vmem:[#allocation7 + $0x20] sm:$0xf]
    %v116 = vld [vmem:[#allocation7 + $0x24] sm:$0xf]
    %v117 = vld [vmem:[#allocation7 + $0x28] sm:$0xf]
    %v118 = vld [vmem:[#allocation7 + $0x2c] sm:$0xf]
    %v119 = vld [vmem:[#allocation7 + $0x30] sm:$0xf]
    %v120 = vld [vmem:[#allocation7 + $0x34] sm:$0xf]
    %v121 = vld [vmem:[#allocation7 + $0x38] sm:$0xf]
    %v122 = vld [vmem:[#allocation7 + $0x3c] sm:$0xf]
    %v123 = vld [vmem:[%s4] sm:$0x1]
    %v125 = vperm.slane %v123, 0
    %v143 = vunpack.c.l.b16 %v107
    %v144 = vunpack.c.l.b16 %v108
    %v145 = vunpack.c.l.b16 %v109
    %v146 = vunpack.c.l.b16 %v110
    %v147 = vunpack.c.l.b16 %v111
    %v148 = vunpack.c.l.b16 %v112
    %v149 = vunpack.c.l.b16 %v113
    %v150 = vunpack.c.l.b16 %v114
    %v151 = vunpack.c.l.b16 %v115
    %v152 = vunpack.c.l.b16 %v116
    %v153 = vunpack.c.l.b16 %v117
    %v154 = vunpack.c.l.b16 %v118
    %v155 = vunpack.c.l.b16 %v119
    %v156 = vunpack.c.l.b16 %v120
    %v157 = vunpack.c.l.b16 %v121
    %v158 = vunpack.c.l.b16 %v122
    %v159 = vpack.c.b16 %v144, %v143
    %v160 = vpack.c.b16 %v146, %v145
    %v161 = vpack.c.b16 %v148, %v147
    %v162 = vpack.c.b16 %v150, %v149
    %v163 = vpack.c.b16 %v152, %v151
    %v164 = vpack.c.b16 %v154, %v153
    %v165 = vpack.c.b16 %v156, %v155
    %v166 = vpack.c.b16 %v158, %v157
    %175 = vmatpush.bf16.msra.mxu0 %v166
    %176 = vmatpush.bf16.msra.mxu0 %v165
    %177 = vmatpush.bf16.msra.mxu0 %v164
    %178 = vmatpush.bf16.msra.mxu0 %v163
    %179 = vmatpush.bf16.msra.mxu0 %v162
    %180 = vmatpush.bf16.msra.mxu0 %v161
    %181 = vmatpush.bf16.msra.mxu0 %v160
    %182 = vmatpush.bf16.msra.mxu0 %v159
    %183 = vmatmul.bf16.gmra.mxu0 %v106
    %v184 = vpop.f32.mrf.mxu0
    %v185 = vadd.f32 %v125, %v184
    %v186 = vpop.f32.mrf.mxu0
    %187 = vdwg.mxu0
    %188 = vst [vmem:[#allocation8] sm:$0xff] %v185
    // Predicated region
    $region34: #{tpu_custom_call.1} parent=1 // pred_check
      _
    $region35: #{tpu_custom_call.1} parent=1 // pred_check_branch
      %190 = sbr.rel (0) target = $region37
    $region36: #{tpu_custom_call.1} parent=1 // pred_region
      %192 = vsyncadd [#allocation4], 0
      %s194 = sshll.u32 [#allocation8], 4
      %s195 = int_to_ptr.vmem [resolvable:$true] %s194
      %s196 = sshll.u32 %s5, 4
      %s197 = int_to_ptr.hbm [resolvable:$true] %s196
      %199 = dma.vmem_to_hbm [thread:$0]  %s195, 128, %s197, [#allocation4]
    $region37: #{tpu_custom_call.1} parent=1 // pred_fallthru
      _
    // Predicated region
    $region38: #{tpu_custom_call.1} parent=1 // pred_check
      _
    $region39: #{tpu_custom_call.1} parent=1 // pred_check_branch
      %201 = sbr.rel (0) target = $region41
    $region40: #{tpu_custom_call.1} parent=1 // pred_region
      %203 = dma.done [#allocation4], 128
    $region41: #{tpu_custom_call.1} parent=1 // pred_fallthru
      _
    %204 = vsyncpa [#allocation3], 1
    %205 = vsyncpa [#allocation6], 1
    %206 = vsyncpa [#allocation4], 1

// kernel: tpu_custom_call.1
$region0: #{tpu_custom_call.1}
  #allocation0 [shape = 'u32[]', space=smem, size = 0x4, offset = 0x4, fixed_abs, tag = 'smem constant byte address 0x4 - core index']
  #allocation1 [shape = 'u32[72,128]{1,0:T(1,128)}', space=vmem, size = 0x9000, scoped, tag = 'internal scratch']
  %s0 = inlined_call_operand.hbm [shape: bf16[8,32], index: 0, kind: input, shape index: {}]
  %s1 = inlined_call_operand.hbm [shape: bf16[32,128], index: 1, kind: input, shape index: {}]
  %s2 = inlined_call_operand.vmem [shape: f32[1,128], index: 2, kind: input, shape index: {}]
  %s3 = inlined_call_operand.hbm [shape: bf16[128,128], index: 3, kind: input, shape index: {}]
  %s4 = inlined_call_operand.vmem [shape: f32[1,128], index: 4, kind: input, shape index: {}]
  %s5 = inlined_call_operand.hbm [shape: f32[8,128], index: 5, kind: output, shape index: {}]
  %s6 = sld [smem:[#allocation0]]
  $region42: #{tpu_custom_call.1} parent=0
    _
  %s8 = ssub.s32 1, %s6
  %s9 = scalar_select 0, %s8, %s6
  $region1: #{tpu_custom_call.1} parent=0
    #allocation2 [shape = 'u8[2048]{0}', space=vmem, size = 0x800, scoped, tag = 'input window, operand 0, single buffered']
    #allocation3 [shape = 's32[1]{0}', space=sflag, size = 0x4, scoped, tag = 'scoped memory for tpu_custom_call.1']
    #allocation4 [shape = 's32[1]{0}', space=sflag, size = 0x4, scoped, tag = 'scoped memory for tpu_custom_call.1']
    #allocation5 [shape = 'u8[8192]{0}', space=vmem, size = 0x2000, scoped, tag = 'input window, operand 1, single buffered']
    #allocation6 [shape = 's32[1]{0}', space=sflag, size = 0x4, scoped, tag = 'scoped memory for tpu_custom_call.1']
    #allocation7 [shape = 'u8[32768]{0}', space=vmem, size = 0x8000, scoped, tag = 'input window, operand 3, single buffered']
    #allocation8 [shape = 'u8[4096]{0}', space=vmem, size = 0x1000, scoped, tag = 'output window, operand 0, single buffered']
    %10 = vsyncpa [#allocation3], 0
    %11 = vsyncpa [#allocation6], 0
    %12 = vsyncpa [#allocation4], 0
    // Predicated region
    $region2: #{tpu_custom_call.1} parent=1 // pred_check
      _
    $region3: #{tpu_custom_call.1} parent=1 // pred_check_branch
      %14 = sbr.rel (0) target = $region5
    $region4: #{tpu_custom_call.1} parent=1 // pred_region
      %16 = vsyncadd [#allocation3], 0
      %s18 = sshll.u32 %s0, 4
      %s19 = int_to_ptr.hbm [resolvable:$true] %s18
      %s20 = sshll.u32 [#allocation2], 4
      %s21 = int_to_ptr.vmem [resolvable:$true] %s20
      %23 = dma.hbm_to_vmem [thread:$0]  %s19, 64, %s21, [#allocation3]
    $region5: #{tpu_custom_call.1} parent=1 // pred_fallthru
      _
    // Predicated region
    $region6: #{tpu_custom_call.1} parent=1 // pred_check
      _
    $region7: #{tpu_custom_call.1} parent=1 // pred_check_branch
      %25 = sbr.rel (0) target = $region9
    $region8: #{tpu_custom_call.1} parent=1 // pred_region
      %27 = vsyncadd [#allocation6], 0
      %s28 = sshll.u32 %s1, 4
      %s29 = int_to_ptr.hbm [resolvable:$true] %s28
      %s30 = sshll.u32 [#allocation5], 4
      %s31 = int_to_ptr.vmem [resolvable:$true] %s30
      %36 = dma.hbm_to_vmem [thread:$0]  %s29, 256, %s31, [#allocation6], 64, 64, 4
    $region9: #{tpu_custom_call.1} parent=1 // pred_fallthru
      _
    // Predicated region
    $region10: #{tpu_custom_call.1} parent=1 // pred_check
      _
    $region11: #{tpu_custom_call.1} parent=1 // pred_check_branch
      %38 = sbr.rel (0) target = $region13
    $region12: #{tpu_custom_call.1} parent=1 // pred_region
      _
    $region13: #{tpu_custom_call.1} parent=1 // pred_fallthru
      _
    // Predicated region
    $region14: #{tpu_custom_call.1} parent=1 // pred_check
      _
    $region15: #{tpu_custom_call.1} parent=1 // pred_check_branch
      %40 = sbr.rel (0) target = $region17
    $region16: #{tpu_custom_call.1} parent=1 // pred_region
      %42 = vsyncadd [#allocation6], 0
      %s43 = sshll.u32 %s3, 4
      %s44 = int_to_ptr.hbm [resolvable:$true] %s43
      %s45 = sshll.u32 [#allocation7], 4
      %s46 = int_to_ptr.vmem [resolvable:$true] %s45
      %51 = dma.hbm_to_vmem [thread:$0]  %s44, 1024, %s46, [#allocation6], 64, 64, 4
    $region17: #{tpu_custom_call.1} parent=1 // pred_fallthru
      _
    // Predicated region
    $region18: #{tpu_custom_call.1} parent=1 // pred_check
      _
    $region19: #{tpu_custom_call.1} parent=1 // pred_check_branch
      %53 = sbr.rel (0) target = $region21
    $region20: #{tpu_custom_call.1} parent=1 // pred_region
      _
    $region21: #{tpu_custom_call.1} parent=1 // pred_fallthru
      _
    // Predicated region
    $region22: #{tpu_custom_call.1} parent=1 // pred_check
      _
    $region23: #{tpu_custom_call.1} parent=1 // pred_check_branch
      %55 = sbr.rel (0) target = $region25
    $region24: #{tpu_custom_call.1} parent=1 // pred_region
      %57 = dma.done [#allocation3], 64
    $region25: #{tpu_custom_call.1} parent=1 // pred_fallthru
      _
    // Predicated region
    $region26: #{tpu_custom_call.1} parent=1 // pred_check
      _
    $region27: #{tpu_custom_call.1} parent=1 // pred_check_branch
      %59 = sbr.rel (0) target = $region29
    $region28: #{tpu_custom_call.1} parent=1 // pred_region
      %61 = dma.done [#allocation6], 256
    $region29: #{tpu_custom_call.1} parent=1 // pred_fallthru
      _
    // Predicated region
    $region30: #{tpu_custom_call.1} parent=1 // pred_check
      _
    $region31: #{tpu_custom_call.1} parent=1 // pred_check_branch
      %63 = sbr.rel (0) target = $region33
    $region32: #{tpu_custom_call.1} parent=1 // pred_region
      %65 = dma.done [#allocation6], 1024
    $region33: #{tpu_custom_call.1} parent=1 // pred_fallthru
      _
    %v67 = vld [vmem:[#allocation2] sm:$0xf]
    %v68 = vld [vmem:[#allocation5] sm:$0xf]
    %v69 = vld [vmem:[#allocation5 + $0x4] sm:$0xf]
    %v70 = vld [vmem:[#allocation5 + $0x8] sm:$0xf]
    %v71 = vld [vmem:[#allocation5 + $0xc] sm:$0xf]
    %v72 = vld [vmem:[%s2] sm:$0x1]
    %v74 = vperm.slane %v72, 0
    %v80 = vunpack.c.l.b16 %v68
    %v81 = vunpack.c.l.b16 %v69
    %v82 = vunpack.c.l.b16 %v70
    %v83 = vunpack.c.l.b16 %v71
    %v84 = vpack.c.b16 %v81, %v80
    %v85 = vpack.c.b16 %v83, %v82
    %vm88 = vcmask 261120
    %v90 = vsel %vm88, %v67, 0
    %92 = vmatpush.bf16.msra.mxu0 0
    %93 = vmatpush.bf16.msra.mxu0 0
    %94 = vmatpush.bf16.msra.mxu0 0
    %95 = vmatpush.bf16.msra.mxu0 0
    %96 = vmatpush.bf16.msra.mxu0 0
    %97 = vmatpush.bf16.msra.mxu0 0
    %98 = vmatpush.bf16.msra.mxu0 %v85
    %99 = vmatpush.bf16.msra.mxu0 %v84
    %100 = vmatmul.bf16.gmra.mxu0 %v90
    %v101 = vpop.f32.mrf.mxu0
    %v102 = vadd.f32 %v74, %v101
    %v103 = vpop.f32.mrf.mxu0
    %104 = vdwg.mxu0
    %v105 = vmax.f32 %v102, 0.0
    %v106 = vpack.c.bf16 %v105, %v105
    %v107 = vld [vmem:[#allocation7] sm:$0xf]
    %v108 = vld [vmem:[#allocation7 + $0x4] sm:$0xf]
    %v109 = vld [vmem:[#allocation7 + $0x8] sm:$0xf]
    %v110 = vld [vmem:[#allocation7 + $0xc] sm:$0xf]
    %v111 = vld [vmem:[#allocation7 + $0x10] sm:$0xf]
    %v112 = vld [vmem:[#allocation7 + $0x14] sm:$0xf]
    %v113 = vld [vmem:[#allocation7 + $0x18] sm:$0xf]
    %v114 = vld [vmem:[#allocation7 + $0x1c] sm:$0xf]
    %v115 = vld [vmem:[#allocation7 + $0x20] sm:$0xf]
    %v116 = vld [vmem:[#allocation7 + $0x24] sm:$0xf]
    %v117 = vld [vmem:[#allocation7 + $0x28] sm:$0xf]
    %v118 = vld [vmem:[#allocation7 + $0x2c] sm:$0xf]
    %v119 = vld [vmem:[#allocation7 + $0x30] sm:$0xf]
    %v120 = vld [vmem:[#allocation7 + $0x34] sm:$0xf]
    %v121 = vld [vmem:[#allocation7 + $0x38] sm:$0xf]
    %v122 = vld [vmem:[#allocation7 + $0x3c] sm:$0xf]
    %v123 = vld [vmem:[%s4] sm:$0x1]
    %v125 = vperm.slane %v123, 0
    %v143 = vunpack.c.l.b16 %v107
    %v144 = vunpack.c.l.b16 %v108
    %v145 = vunpack.c.l.b16 %v109
    %v146 = vunpack.c.l.b16 %v110
    %v147 = vunpack.c.l.b16 %v111
    %v148 = vunpack.c.l.b16 %v112
    %v149 = vunpack.c.l.b16 %v113
    %v150 = vunpack.c.l.b16 %v114
    %v151 = vunpack.c.l.b16 %v115
    %v152 = vunpack.c.l.b16 %v116
    %v153 = vunpack.c.l.b16 %v117
    %v154 = vunpack.c.l.b16 %v118
    %v155 = vunpack.c.l.b16 %v119
    %v156 = vunpack.c.l.b16 %v120
    %v157 = vunpack.c.l.b16 %v121
    %v158 = vunpack.c.l.b16 %v122
    %v159 = vpack.c.b16 %v144, %v143
    %v160 = vpack.c.b16 %v146, %v145
    %v161 = vpack.c.b16 %v148, %v147
    %v162 = vpack.c.b16 %v150, %v149
    %v163 = vpack.c.b16 %v152, %v151
    %v164 = vpack.c.b16 %v154, %v153
    %v165 = vpack.c.b16 %v156, %v155
    %v166 = vpack.c.b16 %v158, %v157
    %175 = vmatpush.bf16.msra.mxu0 %v166
    %176 = vmatpush.bf16.msra.mxu0 %v165
    %177 = vmatpush.bf16.msra.mxu0 %v164
    %178 = vmatpush.bf16.msra.mxu0 %v163
    %179 = vmatpush.bf16.msra.mxu0 %v162
    %180 = vmatpush.bf16.msra.mxu0 %v161
    %181 = vmatpush.bf16.msra.mxu0 %v160
    %182 = vmatpush.bf16.msra.mxu0 %v159
    %183 = vmatmul.bf16.gmra.mxu0 %v106
    %v184 = vpop.f32.mrf.mxu0
    %v185 = vadd.f32 %v125, %v184
    %v186 = vpop.f32.mrf.mxu0
    %187 = vdwg.mxu0
    %188 = vst [vmem:[#allocation8] sm:$0xff] %v185
    // Predicated region
    $region34: #{tpu_custom_call.1} parent=1 // pred_check
      _
    $region35: #{tpu_custom_call.1} parent=1 // pred_check_branch
      %190 = sbr.rel (0) target = $region37
    $region36: #{tpu_custom_call.1} parent=1 // pred_region
      %192 = vsyncadd [#allocation4], 0
      %s194 = sshll.u32 [#allocation8], 4
      %s195 = int_to_ptr.vmem [resolvable:$true] %s194
      %s196 = sshll.u32 %s5, 4
      %s197 = int_to_ptr.hbm [resolvable:$true] %s196
      %199 = dma.vmem_to_hbm [thread:$0]  %s195, 128, %s197, [#allocation4]
    $region37: #{tpu_custom_call.1} parent=1 // pred_fallthru
      _
    // Predicated region
    $region38: #{tpu_custom_call.1} parent=1 // pred_check
      _
    $region39: #{tpu_custom_call.1} parent=1 // pred_check_branch
      %201 = sbr.rel (0) target = $region41
    $region40: #{tpu_custom_call.1} parent=1 // pred_region
      %203 = dma.done [#allocation4], 128
    $region41: #{tpu_custom_call.1} parent=1 // pred_fallthru
      _
    %204 = vsyncpa [#allocation3], 1
    %205 = vsyncpa [#allocation6], 1
    %206 = vsyncpa [#allocation4], 1

</llo_original>
